<compile_context>
chip_gen: v7x
topology: tpu7x:2x2x1
jax: 0.10.0
libtpu: 0.0.40
codegen_flags: <defaults>
</compile_context>

<pallas_src>
import functools

import jax
import jax.numpy as jnp
from jax import lax
from jax.experimental import pallas as pl
from jax.experimental.pallas import tpu as pltpu

NUM_GROUPS = 16
EPS = 1e-5
LANE = 128


def _round_up(x, m):
    return (x + m - 1) // m * m


def _gn_relu_store(acc_t, g_ref, b_ref, o_ref, *, gs):
    """GroupNorm(16) + affine + ReLU on a channel-major (Cout, H*W) f32 block."""
    cout, hw = acc_t.shape
    count = float(hw * gs)

    # Same-group mask from a 2-D int iota (no one-hot input, no MXU matmul).
    ri = lax.broadcasted_iota(jnp.int32, (cout, cout), 0).astype(jnp.float32)
    ci = lax.broadcasted_iota(jnp.int32, (cout, cout), 1).astype(jnp.float32)
    mask = (jnp.floor(ri / float(gs)) == jnp.floor(ci / float(gs)))
    mask = mask.astype(jnp.float32)                              # (Cout, Cout)

    # Per-channel sums are lane-axis reductions; the group all-reduce is a
    # column -> row -> column pair of tiny (Cout, Cout) VPU/XLU passes.
    ch_sum = jnp.sum(acc_t, axis=1, keepdims=True)               # (Cout, 1)
    grp_row = jnp.sum(mask * ch_sum, axis=0, keepdims=True)      # (1, Cout)
    mean_c = jnp.sum(mask * grp_row, axis=1, keepdims=True) / (gs * count)

    centered = acc_t - mean_c                                    # (Cout, HW)
    ch_ss = jnp.sum(centered * centered, axis=1, keepdims=True)  # (Cout, 1)
    var_row = jnp.sum(mask * ch_ss, axis=0, keepdims=True) / count
    inv_row = lax.rsqrt(var_row + EPS)                           # EUP
    inv_c = jnp.sum(mask * inv_row, axis=1, keepdims=True) / float(gs)

    # Folded affine + ReLU, lane-dense over 256 lanes.
    scale_c = inv_c * g_ref[...]                                 # (Cout, 1)
    y = jnp.maximum(centered * scale_c + b_ref[...], 0.0)        # (Cout, HW)
    o_ref[0] = y.astype(o_ref.dtype)


def _aspp_direct_kernel(lhs_ref, w_ref, g_ref, b_ref, o_ref, *, gs):
    # lhs_ref: (1, Kd, HW) channel-major patches (lane-dense, K padded to 128)
    # w_ref:   (Cout, Kd)  weights, zero-padded to match
    acc_t = jnp.dot(w_ref[...], lhs_ref[0],
                    preferred_element_type=jnp.float32)          # (Cout, HW)
    _gn_relu_store(acc_t, g_ref, b_ref, o_ref, gs=gs)


def _aspp_per_tap_kernel(x_ref, w_ref, g_ref, b_ref, o_ref, *,
                         rate, ksize, hw, gs):
    # x_ref: (1, Hp, Wp, Cin) with Cin >= 128 (channel axis already lane-dense)
    # w_ref: (KH*KW*Cin, Cout) in (kh, kw, cin) contraction order
    KH, KW = ksize
    H, W = hw
    Cin = x_ref.shape[-1]
    acc = None
    t = 0
    for kh in range(KH):
        for kw in range(KW):
            xs = x_ref[0, kh * rate:kh * rate + H, kw * rate:kw * rate + W, :]
            part = jnp.dot(xs.reshape(H * W, Cin),
                           w_ref[t * Cin:(t + 1) * Cin, :],
                           preferred_element_type=jnp.float32)
            acc = part if acc is None else acc + part
            t += 1
    # Single small (H*W, Cout) -> (Cout, H*W) transpose; epilogue is lane-dense.
    _gn_relu_store(acc.T, g_ref, b_ref, o_ref, gs=gs)


def _vmem_limit_bytes(step_bytes):
    """Generation-aware VMEM budget (~48 MiB on v7x, ~96 MiB on v5e/v6e)."""
    try:
        cap = int(getattr(pltpu.get_tpu_info(), "vmem_capacity_bytes",
                          128 << 20))
    except Exception:
        cap = 128 << 20
    cap = (cap * 3) // 4            # headroom for Mosaic internal scratch
    return int(min(max(int(step_bytes * 1.3), 16 << 20), cap))


@functools.partial(jax.jit,
                   static_argnames=("rate", "compute_dtype", "out_dtype"))
def aspp_forward(x_nchw, w_hwio, gamma, beta, rate,
                 compute_dtype=jnp.float32, out_dtype=jnp.float32):
    """ASPP_module.forward: (N, Cin, H, W) -> (N, Cout, H, W)."""
    N, Cin, H, W = x_nchw.shape
    KH, KW, _, Cout = w_hwio.shape
    assert Cout % NUM_GROUPS == 0
    gs = Cout // NUM_GROUPS
    HW = H * W
    KK = KH * KW
    pad = 0 if rate == 1 else rate
    Hp, Wp = H + 2 * pad, W + 2 * pad
    isz = jnp.dtype(compute_dtype).itemsize
    osz = jnp.dtype(out_dtype).itemsize

    gamma2 = gamma.reshape(Cout, 1).astype(jnp.float32)
    beta2 = beta.reshape(Cout, 1).astype(jnp.float32)

    # im2col only pays when Cin is below the MXU K tile; otherwise per-tap
    # matmuls already saturate K and the patch duplication is pure waste.
    per_tap = (KK > 1) and (Cin >= LANE)

    if per_tap:
        # ---- production path: Cin >= 128, no im2col, per-tap accumulation ----
        x_nhwc = jnp.transpose(x_nchw, (0, 2, 3, 1))
        x_in = jnp.pad(x_nhwc, ((0, 0), (pad, pad), (pad, pad), (0, 0)))
        x_in = x_in.astype(compute_dtype)                   # (N, Hp, Wp, Cin)
        w_in = w_hwio.reshape(KK * Cin, Cout).astype(compute_dtype)

        kernel = functools.partial(_aspp_per_tap_kernel, rate=rate,
                                   ksize=(KH, KW), hw=(H, W), gs=gs)
        in_specs = [
            pl.BlockSpec((1, Hp, Wp, Cin), lambda n: (n, 0, 0, 0)),
            # Grid-invariant operands below (index_map always (0, 0)).
            pl.BlockSpec((KK * Cin, Cout), lambda n: (0, 0)),
            pl.BlockSpec((Cout, 1), lambda n: (0, 0)),
            pl.BlockSpec((Cout, 1), lambda n: (0, 0)),
        ]
        operands = (x_in, w_in, gamma2, beta2)
        step_bytes = (2 * Hp * Wp * Cin * isz          # input block (x2 bufs)
                      + 2 * KK * Cin * Cout * isz      # weights (x2 bufs)
                      + 4 * Cout * 4                   # gamma/beta
                      + 2 * Cout * HW * osz            # output block (x2 bufs)
                      + HW * Cin * isz                 # live tap slice
                      + 4 * HW * Cout * 4)             # live f32 intermediates
        in_bytes = x_in.size * isz + w_in.size * isz
    else:
        # ---- small-Cin / 1x1 path: wrapper presents lane-dense channel-major
        # patches (N, Kd, H*W); Kd = K*K*Cin rounded up to 128 (zero-padded ->
        # clean MXU K tile, no masked stores). For rate==1 there is no patch
        # duplication at all, only channel padding. ----
        Kd = _round_up(KK * Cin, LANE)
        x_pad = jnp.pad(x_nchw, ((0, 0), (0, 0), (pad, pad), (pad, pad)))
        taps = []
        for kh in range(KH):
            for kw in range(KW):
                sl = x_pad[:, :, kh * rate:kh * rate + H,
                           kw * rate:kw * rate + W]      # (N, Cin, H, W)
                taps.append(sl.reshape(N, Cin, HW))
        lhs_t = jnp.concatenate(taps, axis=1) if len(taps) > 1 else taps[0]
        if Kd > KK * Cin:
            lhs_t = jnp.pad(lhs_t, ((0, 0), (0, Kd - KK * Cin), (0, 0)))
        lhs_t = lhs_t.astype(compute_dtype)                   # (N, Kd, HW)

        w_t = jnp.transpose(w_hwio.reshape(KK * Cin, Cout), (1, 0))
        if Kd > KK * Cin:
            w_t = jnp.pad(w_t, ((0, 0), (0, Kd - KK * Cin)))
        w_t = w_t.astype(compute_dtype)                       # (Cout, Kd)

        kernel = functools.partial(_aspp_direct_kernel, gs=gs)
        in_specs = [
            pl.BlockSpec((1, Kd, HW), lambda n: (n, 0, 0)),
            pl.BlockSpec((Cout, Kd), lambda n: (0, 0)),
            pl.BlockSpec((Cout, 1), lambda n: (0, 0)),
            pl.BlockSpec((Cout, 1), lambda n: (0, 0)),
        ]
        operands = (lhs_t, w_t, gamma2, beta2)
        step_bytes = (2 * Kd * HW * isz + 2 * Cout * Kd * isz
                      + 4 * Cout * 4 + 2 * Cout * HW * osz
                      + 4 * Cout * HW * 4 + Cout * Cout * 4)
        in_bytes = lhs_t.size * isz + w_t.size * isz

    flops = 2 * N * HW * KK * Cin * Cout + 10 * N * HW * Cout
    cost = pl.CostEstimate(flops=flops, transcendentals=N * NUM_GROUPS,
                           bytes_accessed=in_bytes + N * Cout * HW * osz)

    out = pl.pallas_call(
        kernel,
        out_shape=jax.ShapeDtypeStruct((N, Cout, HW), out_dtype),
        grid_spec=pltpu.PrefetchScalarGridSpec(
            num_scalar_prefetch=0,
            grid=(N,),                      # batch axis: feeds both v7x TCs
            in_specs=in_specs,
            out_specs=pl.BlockSpec((1, Cout, HW), lambda n: (n, 0, 0)),
        ),
        compiler_params=pltpu.CompilerParams(
            dimension_semantics=("parallel",),
            vmem_limit_bytes=_vmem_limit_bytes(step_bytes)),
        cost_estimate=cost,
    )(*operands)

    # (N, Cout, H*W) -> (N, Cout, H, W): metadata-only (already NCHW order).
    return out.reshape(N, Cout, H, W)


def ref_forward(x_nchw, w_hwio, gamma, beta, rate):
    """Pure-JAX reference (mirrors the PyTorch module)."""
    pad = 0 if rate == 1 else rate
    w_oihw = jnp.transpose(w_hwio, (3, 2, 0, 1))
    y = lax.conv_general_dilated(
        x_nchw, w_oihw, window_strides=(1, 1),
        padding=((pad, pad), (pad, pad)),
        rhs_dilation=(rate, rate),
        dimension_numbers=('NCHW', 'OIHW', 'NCHW'))
    N, C, H, W = y.shape
    gs = C // NUM_GROUPS
    yg = y.reshape(N, NUM_GROUPS, gs * H * W)
    mean = yg.mean(-1, keepdims=True)
    var = yg.var(-1, keepdims=True)
    yn = ((yg - mean) / jnp.sqrt(var + EPS)).reshape(N, C, H, W)
    yn = yn * gamma[None, :, None, None] + beta[None, :, None, None]
    return jnp.maximum(yn, 0.0)


if __name__ == "__main__":
    N, H, W = 2, 16, 16
    planes = 32

    key = jax.random.PRNGKey(0)
    gamma = jnp.ones((planes,), jnp.float32)   # GroupNorm init: weight = 1
    beta = jnp.zeros((planes,), jnp.float32)   #                 bias   = 0

    configs = [
        # (inplanes, rate, compute_dtype, out_dtype, atol, rtol)
        (8,   2, jnp.float32,  jnp.float32,  1e-3, 1e-3),  # 3x3 dilated, lane-dense patch path
        (8,   2, jnp.bfloat16, jnp.bfloat16, 8e-2, 8e-2),  # bf16 MXU operands + bf16 writeback
        (8,   1, jnp.float32,  jnp.float32,  1e-3, 1e-3),  # 1x1 conv (no patch duplication)
        (128, 2, jnp.float32,  jnp.float32,  2e-2, 2e-2),  # large-Cin per-tap path (no im2col)
    ]

    for idx, (inplanes, rate, cdt, odt, atol, rtol) in enumerate(configs):
        kx, kw_key = jax.random.split(jax.random.fold_in(key, idx))
        x = jax.random.normal(kx, (N, inplanes, H, W), dtype=jnp.float32)

        KH = KW = 1 if rate == 1 else 3
        fan_in = inplanes * KH * KW            # kaiming_normal_ (fan_in, gain=sqrt(2))
        std = (2.0 / fan_in) ** 0.5
        w_hwio = std * jax.random.normal(kw_key, (KH, KW, inplanes, planes),
                                         dtype=jnp.float32)

        ref = ref_forward(x, w_hwio, gamma, beta, rate)
        out = jax.block_until_ready(
            aspp_forward(x, w_hwio, gamma, beta, rate=rate,
                         compute_dtype=cdt, out_dtype=odt))
        assert out.shape == (N, planes, H, W), out.shape
        out_f32 = out.astype(jnp.float32)
        err = float(jnp.max(jnp.abs(out_f32 - ref)))
        assert jnp.allclose(out_f32, ref, atol=atol, rtol=rtol), (
            inplanes, rate, str(cdt), str(odt), err)

    print("KERNEL_OK")
</pallas_src>

<mosaic_0001>
module attributes {stable_mosaic.version = 11 : i64} {
  func.func @_aspp_direct_kernel(%arg0: i32, %arg1: memref<1x128x256xf32, #tpu.memory_space<vmem>>, %arg2: memref<32x128xf32, #tpu.memory_space<vmem>>, %arg3: memref<32x1xf32, #tpu.memory_space<vmem>>, %arg4: memref<32x1xf32, #tpu.memory_space<vmem>>, %arg5: memref<1x32x256xf32, #tpu.memory_space<vmem>>) attributes {dimension_semantics = [#tpu.dimension_semantics<parallel>], iteration_bounds = array<i64: 2>, scalar_prefetch = 0 : i64, scratch_operands = 0 : i64, tpu.core_type = #tpu.core_type<tc>, window_params = [{transform_indices = @transform_0, window_bounds = array<i64: 1, 128, 256>}, {pipeline_mode = #tpu.pipeline_mode<synchronous>, transform_indices = @transform_1, window_bounds = array<i64: 32, 128>}, {pipeline_mode = #tpu.pipeline_mode<synchronous>, transform_indices = @transform_2, window_bounds = array<i64: 32, 1>}, {pipeline_mode = #tpu.pipeline_mode<synchronous>, transform_indices = @transform_3, window_bounds = array<i64: 32, 1>}, {transform_indices = @transform_4, window_bounds = array<i64: 1, 32, 256>}]} {
    %c0 = arith.constant 0 : index
    %c0_0 = arith.constant 0 : index
    %0 = vector.load %arg2[%c0, %c0_0] : memref<32x128xf32, #tpu.memory_space<vmem>>, vector<32x128xf32>
    %c0_1 = arith.constant 0 : index
    %c0_2 = arith.constant 0 : index
    %c0_3 = arith.constant 0 : index
    %1 = vector.load %arg1[%c0_1, %c0_2, %c0_3] : memref<1x128x256xf32, #tpu.memory_space<vmem>>, vector<1x128x256xf32>
    %2 = vector.shape_cast %1 : vector<1x128x256xf32> to vector<128x256xf32>
    %cst = arith.constant dense<0.000000e+00> : vector<32x256xf32>
    %3 = tpu.matmul %0, %2, %cst {dimension_numbers = #tpu.dot_dimension_numbers<[1], [0], [0], [1], [0, 0, 1, 1], [], []>} : vector<32x128xf32>, vector<128x256xf32>, vector<32x256xf32> -> vector<32x256xf32>
    %4 = tpu.iota {dimensions = array<i32: 0>} : vector<32x32xi32>
    %5 = arith.sitofp %4 : vector<32x32xi32> to vector<32x32xf32>
    %6 = tpu.iota {dimensions = array<i32: 1>} : vector<32x32xi32>
    %7 = arith.sitofp %6 : vector<32x32xi32> to vector<32x32xf32>
    %cst_4 = arith.constant 2.000000e+00 : f32
    %8 = vector.broadcast %cst_4 : f32 to vector<32x32xf32>
    %9 = arith.divf %5, %8 : vector<32x32xf32>
    %10 = math.floor %9 : vector<32x32xf32>
    %cst_5 = arith.constant 2.000000e+00 : f32
    %11 = vector.broadcast %cst_5 : f32 to vector<32x32xf32>
    %12 = arith.divf %7, %11 : vector<32x32xf32>
    %13 = math.floor %12 : vector<32x32xf32>
    %14 = arith.cmpf oeq, %10, %13 : vector<32x32xf32>
    %15 = arith.extui %14 : vector<32x32xi1> to vector<32x32xi32>
    %16 = arith.sitofp %15 : vector<32x32xi32> to vector<32x32xf32>
    %cst_6 = arith.constant dense<0.000000e+00> : vector<32xf32>
    %17 = vector.multi_reduction <add>, %3, %cst_6 [1] : vector<32x256xf32> to vector<32xf32>
    %18 = vector.shape_cast %17 : vector<32xf32> to vector<32x1xf32>
    %19 = vector.broadcast %18 : vector<32x1xf32> to vector<32x32xf32>
    %20 = arith.mulf %16, %19 : vector<32x32xf32>
    %cst_7 = arith.constant dense<0.000000e+00> : vector<32xf32>
    %21 = vector.multi_reduction <add>, %20, %cst_7 [0] : vector<32x32xf32> to vector<32xf32>
    %22 = vector.shape_cast %21 : vector<32xf32> to vector<1x32xf32>
    %23 = vector.broadcast %22 : vector<1x32xf32> to vector<32x32xf32>
    %24 = arith.mulf %16, %23 : vector<32x32xf32>
    %cst_8 = arith.constant dense<0.000000e+00> : vector<32xf32>
    %25 = vector.multi_reduction <add>, %24, %cst_8 [1] : vector<32x32xf32> to vector<32xf32>
    %26 = vector.shape_cast %25 : vector<32xf32> to vector<32x1xf32>
    %cst_9 = arith.constant 1.024000e+03 : f32
    %27 = vector.broadcast %cst_9 : f32 to vector<32x1xf32>
    %28 = arith.divf %26, %27 : vector<32x1xf32>
    %29 = vector.broadcast %28 : vector<32x1xf32> to vector<32x256xf32>
    %30 = arith.subf %3, %29 : vector<32x256xf32>
    %31 = arith.mulf %30, %30 : vector<32x256xf32>
    %cst_10 = arith.constant dense<0.000000e+00> : vector<32xf32>
    %32 = vector.multi_reduction <add>, %31, %cst_10 [1] : vector<32x256xf32> to vector<32xf32>
    %33 = vector.shape_cast %32 : vector<32xf32> to vector<32x1xf32>
    %34 = vector.broadcast %33 : vector<32x1xf32> to vector<32x32xf32>
    %35 = arith.mulf %16, %34 : vector<32x32xf32>
    %cst_11 = arith.constant dense<0.000000e+00> : vector<32xf32>
    %36 = vector.multi_reduction <add>, %35, %cst_11 [0] : vector<32x32xf32> to vector<32xf32>
    %37 = vector.shape_cast %36 : vector<32xf32> to vector<1x32xf32>
    %cst_12 = arith.constant 5.120000e+02 : f32
    %38 = vector.broadcast %cst_12 : f32 to vector<1x32xf32>
    %39 = arith.divf %37, %38 : vector<1x32xf32>
    %cst_13 = arith.constant 9.99999974E-6 : f32
    %40 = vector.broadcast %cst_13 : f32 to vector<1x32xf32>
    %41 = arith.addf %39, %40 : vector<1x32xf32>
    %42 = math.rsqrt %41 : vector<1x32xf32>
    %43 = vector.broadcast %42 : vector<1x32xf32> to vector<32x32xf32>
    %44 = arith.mulf %16, %43 : vector<32x32xf32>
    %cst_14 = arith.constant dense<0.000000e+00> : vector<32xf32>
    %45 = vector.multi_reduction <add>, %44, %cst_14 [1] : vector<32x32xf32> to vector<32xf32>
    %46 = vector.shape_cast %45 : vector<32xf32> to vector<32x1xf32>
    %cst_15 = arith.constant 2.000000e+00 : f32
    %47 = vector.broadcast %cst_15 : f32 to vector<32x1xf32>
    %48 = arith.divf %46, %47 : vector<32x1xf32>
    %c0_16 = arith.constant 0 : index
    %c0_17 = arith.constant 0 : index
    %49 = vector.load %arg3[%c0_16, %c0_17] : memref<32x1xf32, #tpu.memory_space<vmem>>, vector<32x1xf32>
    %50 = arith.mulf %48, %49 : vector<32x1xf32>
    %51 = vector.broadcast %50 : vector<32x1xf32> to vector<32x256xf32>
    %52 = arith.mulf %30, %51 : vector<32x256xf32>
    %c0_18 = arith.constant 0 : index
    %c0_19 = arith.constant 0 : index
    %53 = vector.load %arg4[%c0_18, %c0_19] : memref<32x1xf32, #tpu.memory_space<vmem>>, vector<32x1xf32>
    %54 = vector.broadcast %53 : vector<32x1xf32> to vector<32x256xf32>
    %55 = arith.addf %52, %54 : vector<32x256xf32>
    %cst_20 = arith.constant 0.000000e+00 : f32
    %56 = vector.broadcast %cst_20 : f32 to vector<32x256xf32>
    %57 = arith.maximumf %55, %56 : vector<32x256xf32>
    %c0_21 = arith.constant 0 : index
    %c0_22 = arith.constant 0 : index
    %c0_23 = arith.constant 0 : index
    %58 = vector.load %arg5[%c0_21, %c0_22, %c0_23] : memref<1x32x256xf32, #tpu.memory_space<vmem>>, vector<1x32x256xf32>
    %59 = vector.shape_cast %58 : vector<1x32x256xf32> to vector<32x256xf32>
    %60 = vector.shape_cast %57 : vector<32x256xf32> to vector<1x32x256xf32>
    tpu.vector_store %arg5[%c0_21, %c0_22, %c0_23], %60 {strides = array<i32>} : memref<1x32x256xf32, #tpu.memory_space<vmem>>, vector<1x32x256xf32>,
    return
  }
  func.func @transform_0(%arg0: i32) -> (i32, i32, i32) {
    %c0_i32 = arith.constant 0 : i32
    %c0_i32_0 = arith.constant 0 : i32
    %c0_i32_1 = arith.constant 0 : i32
    return %arg0, %c0_i32, %c0_i32_0 : i32, i32, i32
  }
  func.func @transform_1(%arg0: i32) -> (i32, i32) {
    %c0_i32 = arith.constant 0 : i32
    %c0_i32_0 = arith.constant 0 : i32
    %c0_i32_1 = arith.constant 0 : i32
    return %c0_i32, %c0_i32_0 : i32, i32
  }
  func.func @transform_2(%arg0: i32) -> (i32, i32) {
    %c0_i32 = arith.constant 0 : i32
    %c0_i32_0 = arith.constant 0 : i32
    %c0_i32_1 = arith.constant 0 : i32
    return %c0_i32, %c0_i32_0 : i32, i32
  }
  func.func @transform_3(%arg0: i32) -> (i32, i32) {
    %c0_i32 = arith.constant 0 : i32
    %c0_i32_0 = arith.constant 0 : i32
    %c0_i32_1 = arith.constant 0 : i32
    return %c0_i32, %c0_i32_0 : i32, i32
  }
  func.func @transform_4(%arg0: i32) -> (i32, i32, i32) {
    %c0_i32 = arith.constant 0 : i32
    %c0_i32_0 = arith.constant 0 : i32
    %c0_i32_1 = arith.constant 0 : i32
    return %arg0, %c0_i32, %c0_i32_0 : i32, i32, i32
  }
}

</mosaic_0001>

<llo_original>
// kernel: aspp_forward.1
$region0: #{aspp_forward.1}
  #allocation0 [shape = 'u32[]', space=smem, size = 0x4, offset = 0x4, fixed_abs, tag = 'smem constant byte address 0x4 - core index']
  #allocation1 [shape = 'u32[144,128]{1,0:T(1,128)}', space=vmem, size = 0x12000, scoped, tag = 'internal scratch']
  %s0 = inlined_call_operand.vmem [shape: f32[2,128,256], index: 0, kind: input, shape index: {}]
  %s1 = inlined_call_operand.vmem [shape: f32[32,128], index: 1, kind: input, shape index: {}]
  %s2 = inlined_call_operand.vmem [shape: f32[32,1], index: 2, kind: input, shape index: {}]
  %s3 = inlined_call_operand.vmem [shape: f32[32,1], index: 3, kind: input, shape index: {}]
  %s4 = inlined_call_operand.vmem [shape: f32[2,32,256], index: 4, kind: output, shape index: {}]
  %s5 = sld [smem:[#allocation0]]
  $region49: #{aspp_forward.1} parent=0
    _
  %s7 = ssub.s32 1, %s5
  %s8 = scalar_select 0, %s7, %s5
  loop: start=0, step=1, limit=4
  $region2: #{aspp_forward.1} parent=0 // loop_pre_header
    _
  $region3: #{aspp_forward.1} parent=0 // loop_header
    %s10 = sphi 0, %s14
    %p11 = scmp.ge.s32.totalorder %s10, 4
    %s20 = sphi 0, %s22
    %s23 = sphi 0, %s20
    %s24 = sphi 0, %s23
    %s40 = sphi 0, %s24
    %s44 = sphi 0, %s44
    %s46 = sphi 0, %s44
    %s47 = sphi 0, %s46
    %s61 = sphi 0, %s47
    %s65 = sphi 0, %s65
    %s67 = sphi 0, %s65
    %s68 = sphi 0, %s67
    %s82 = sphi 0, %s68
    %s86 = sphi 0, %s86
    %s88 = sphi 0, %s86
    %s89 = sphi 0, %s88
    %s103 = sphi 0, %s89
    %s109 = sphi 0, %s111
    %s112 = sphi 0, %s109
    %s113 = sphi 0, %s112
    %s129 = sphi 0, %s113
  $region4: #{aspp_forward.1} parent=0 // loop_header_branch
    %13 = sbr.rel (%p11) target = $region8
  $region5: #{aspp_forward.1} parent=0 // loop_body
    %s15 = ssub.s32 %s10, 1
    %s16 = ssub.s32 %s10, 2
    %s17 = sadd.s32 %s10, 1
    %s18 = ssub.s32 %s10, %s17
    %p19 = scmp.eq.s32.totalorder %s18, 0
    %s21 = sadd.s32 %s20, 1
    %s22 = scalar_select %p19, %s20, %s21
    %p25 = pneg %p19
    %p26 = scmp.eq.s32.totalorder %s10, 1
    %p27 = por %p25, %p26
    %p28 = scmp.ne.s32.totalorder %s20, %s23
    %p29 = scmp.eq.s32.totalorder %s10, 0
    %p30 = por %p28, %p29
    %p31 = scmp.ne.s32.totalorder %s20, %s23
    %p32 = scmp.eq.s32.totalorder %s15, 1
    %p33 = por %p31, %p32
    %p34 = scmp.ne.s32.totalorder %s23, %s24
    %p35 = scmp.eq.s32.totalorder %s15, 0
    %p36 = por %p34, %p35
    %p37 = scmp.ne.s32.totalorder %s23, %s24
    %p38 = scmp.eq.s32.totalorder %s16, 1
    %p39 = por %p37, %p38
    %p41 = scmp.ne.s32.totalorder %s24, %s40
    %p42 = scmp.eq.s32.totalorder %s16, 0
    %p43 = por %p41, %p42
    %s45 = sadd.s32 %s44, 1
    %p48 = scmp.eq.s32.totalorder %s10, 1
    %p49 = scmp.ne.s32.totalorder %s44, %s46
    %p50 = scmp.eq.s32.totalorder %s10, 0
    %p51 = por %p49, %p50
    %p52 = scmp.ne.s32.totalorder %s44, %s46
    %p53 = scmp.eq.s32.totalorder %s15, 1
    %p54 = por %p52, %p53
    %p55 = scmp.ne.s32.totalorder %s46, %s47
    %p56 = scmp.eq.s32.totalorder %s15, 0
    %p57 = por %p55, %p56
    %p58 = scmp.ne.s32.totalorder %s46, %s47
    %p59 = scmp.eq.s32.totalorder %s16, 1
    %p60 = por %p58, %p59
    %p62 = scmp.ne.s32.totalorder %s47, %s61
    %p63 = scmp.eq.s32.totalorder %s16, 0
    %p64 = por %p62, %p63
    %s66 = sadd.s32 %s65, 1
    %p69 = scmp.eq.s32.totalorder %s10, 1
    %p70 = scmp.ne.s32.totalorder %s65, %s67
    %p71 = scmp.eq.s32.totalorder %s10, 0
    %p72 = por %p70, %p71
    %p73 = scmp.ne.s32.totalorder %s65, %s67
    %p74 = scmp.eq.s32.totalorder %s15, 1
    %p75 = por %p73, %p74
    %p76 = scmp.ne.s32.totalorder %s67, %s68
    %p77 = scmp.eq.s32.totalorder %s15, 0
    %p78 = por %p76, %p77
    %p79 = scmp.ne.s32.totalorder %s67, %s68
    %p80 = scmp.eq.s32.totalorder %s16, 1
    %p81 = por %p79, %p80
    %p83 = scmp.ne.s32.totalorder %s68, %s82
    %p84 = scmp.eq.s32.totalorder %s16, 0
    %p85 = por %p83, %p84
    %s87 = sadd.s32 %s86, 1
    %p90 = scmp.eq.s32.totalorder %s10, 1
    %p91 = scmp.ne.s32.totalorder %s86, %s88
    %p92 = scmp.eq.s32.totalorder %s10, 0
    %p93 = por %p91, %p92
    %p94 = scmp.ne.s32.totalorder %s86, %s88
    %p95 = scmp.eq.s32.totalorder %s15, 1
    %p96 = por %p94, %p95
    %p97 = scmp.ne.s32.totalorder %s88, %s89
    %p98 = scmp.eq.s32.totalorder %s15, 0
    %p99 = por %p97, %p98
    %p100 = scmp.ne.s32.totalorder %s88, %s89
    %p101 = scmp.eq.s32.totalorder %s16, 1
    %p102 = por %p100, %p101
    %p104 = scmp.ne.s32.totalorder %s89, %s103
    %p105 = scmp.eq.s32.totalorder %s16, 0
    %p106 = por %p104, %p105
    %s107 = ssub.s32 %s10, %s17
    %p108 = scmp.eq.s32.totalorder %s107, 0
    %s110 = sadd.s32 %s109, 1
    %s111 = scalar_select %p108, %s109, %s110
    %p114 = pneg %p108
    %p115 = scmp.eq.s32.totalorder %s10, 1
    %p116 = por %p114, %p115
    %p117 = scmp.ne.s32.totalorder %s109, %s112
    %p118 = scmp.eq.s32.totalorder %s10, 0
    %p119 = por %p117, %p118
    %p120 = scmp.ne.s32.totalorder %s109, %s112
    %p121 = scmp.eq.s32.totalorder %s15, 1
    %p122 = por %p120, %p121
    %p123 = scmp.ne.s32.totalorder %s112, %s113
    %p124 = scmp.eq.s32.totalorder %s15, 0
    %p125 = por %p123, %p124
    %p126 = scmp.ne.s32.totalorder %s112, %s113
    %p127 = scmp.eq.s32.totalorder %s16, 1
    %p128 = por %p126, %p127
    %p130 = scmp.ne.s32.totalorder %s113, %s129
    %p131 = scmp.eq.s32.totalorder %s16, 0
    %p132 = por %p130, %p131
    %p133 = scmp.le.s32.totalorder 1, %s10
    %p134 = scmp.lt.s32.totalorder %s10, 3
    %p135 = pnand %p133, %p134
    %p136 = pneg %p135
    // Predicated region
    $region9: #{aspp_forward.1} parent=5 // pred_check
      _
    $region10: #{aspp_forward.1} parent=5 // pred_check_branch
      %138 = sbr.rel (%p135) target = $region12
    $region11: #{aspp_forward.1} parent=5 // pred_region
      %s139 = ssub.s32 %s10, 1
      // Predicated region
      $region13: #{aspp_forward.1} parent=11 // pred_check
        %p140 = pneg %p57
      $region14: #{aspp_forward.1} parent=11 // pred_check_branch
        %142 = sbr.rel (%p140) target = $region16
      $region15: #{aspp_forward.1} parent=11 // pred_region
        _
      $region16: #{aspp_forward.1} parent=11 // pred_fallthru
        _
      // Predicated region
      $region17: #{aspp_forward.1} parent=11 // pred_check
        %p143 = pneg %p78
      $region18: #{aspp_forward.1} parent=11 // pred_check_branch
        %145 = sbr.rel (%p143) target = $region20
      $region19: #{aspp_forward.1} parent=11 // pred_region
        _
      $region20: #{aspp_forward.1} parent=11 // pred_fallthru
        _
      // Predicated region
      $region21: #{aspp_forward.1} parent=11 // pred_check
        %p146 = pneg %p99
      $region22: #{aspp_forward.1} parent=11 // pred_check_branch
        %148 = sbr.rel (%p146) target = $region24
      $region23: #{aspp_forward.1} parent=11 // pred_region
        _
      $region24: #{aspp_forward.1} parent=11 // pred_fallthru
        _
    $region12: #{aspp_forward.1} parent=5 // pred_fallthru
      _
    %p149 = scmp.lt.s32.totalorder %s10, 2
    // Predicated region
    $region25: #{aspp_forward.1} parent=5 // pred_check
      %p150 = pneg %p149
    $region26: #{aspp_forward.1} parent=5 // pred_check_branch
      %152 = sbr.rel (%p150) target = $region28
    $region27: #{aspp_forward.1} parent=5 // pred_region
      // Predicated region
      $region29: #{aspp_forward.1} parent=27 // pred_check
        %p153 = pneg %p30
      $region30: #{aspp_forward.1} parent=27 // pred_check_branch
        %155 = sbr.rel (%p153) target = $region32
      $region31: #{aspp_forward.1} parent=27 // pred_region
        %p156 = scmp.lt.s32.totalorder %s10, 1
        %s157 = scalar_select %p156, %s10, 1
        %s158 = smul.addr %s157, 32
        %s159 = smul.addr %s158, 8
        %s160 = scalar_lea.vmem %s0, %s159
      $region32: #{aspp_forward.1} parent=27 // pred_fallthru
        _
    $region28: #{aspp_forward.1} parent=5 // pred_fallthru
      _
    %p161 = scmp.le.s32.totalorder 1, %s10
    %p162 = scmp.lt.s32.totalorder %s10, 3
    %p163 = pnand %p161, %p162
    %p164 = pneg %p163
    // Predicated region
    $region33: #{aspp_forward.1} parent=5 // pred_check
      _
    $region34: #{aspp_forward.1} parent=5 // pred_check_branch
      %166 = sbr.rel (%p163) target = $region36
    $region35: #{aspp_forward.1} parent=5 // pred_region
      %s167 = ssub.s32 %s10, 1
      %p168 = scmp.lt.s32.totalorder %s15, 1
      %s169 = scalar_select %p168, %s15, 1
      %s170 = smul.addr %s169, 32
      %s171 = smul.addr %s170, 8
      %s172 = scalar_lea.vmem %s0, %s171
      %p173 = pneg %p36
      %p174 = pneg %p33
      %p175 = pneg %p57
      %p176 = pneg %p54
      %p177 = pneg %p78
      %p178 = pneg %p75
      %p179 = pneg %p99
      %p180 = pneg %p96
      %p181 = pneg %p125
      %p182 = pneg %p122
      %p183 = scmp.lt.s32.totalorder %s15, 1
      %s184 = scalar_select %p183, %s15, 1
      %s185 = smul.addr %s184, 8
      %s186 = smul.addr %s185, 8
      %s187 = scalar_lea.vmem %s4, %s186
      %p188 = scmp.lt.s32.totalorder %s15, 1
      %s189 = scalar_select %p188, %s15, 1
      %s190 = smul.addr %s189, 32
      %s191 = smul.addr %s190, 8
      %s192 = scalar_lea.vmem %s0, %s191
      %p193 = scmp.lt.s32.totalorder %s15, 1
      %s194 = scalar_select %p193, %s15, 1
      %s195 = smul.addr %s194, 8
      %s196 = smul.addr %s195, 8
      %s197 = scalar_lea.vmem %s4, %s196
      %v198 = vld [vmem:[%s1] sm:$0xff]
      %v199 = vld [vmem:[%s1 + $0x8] sm:$0xff]
      %v200 = vld [vmem:[%s1 + $0x10] sm:$0xff]
      %v201 = vld [vmem:[%s1 + $0x18] sm:$0xff]
      %v202 = vld [vmem:[%s192] sm:$0xff]
      %v203 = vld [vmem:[%s192 + $0x8] sm:$0xff]
      %v204 = vld [vmem:[%s192 + $0x10] sm:$0xff]
      %v205 = vld [vmem:[%s192 + $0x18] sm:$0xff]
      %v206 = vld [vmem:[%s192 + $0x20] sm:$0xff]
      %v207 = vld [vmem:[%s192 + $0x28] sm:$0xff]
      %v208 = vld [vmem:[%s192 + $0x30] sm:$0xff]
      %v209 = vld [vmem:[%s192 + $0x38] sm:$0xff]
      %v210 = vld [vmem:[%s192 + $0x40] sm:$0xff]
      %v211 = vld [vmem:[%s192 + $0x48] sm:$0xff]
      %v212 = vld [vmem:[%s192 + $0x50] sm:$0xff]
      %v213 = vld [vmem:[%s192 + $0x58] sm:$0xff]
      %v214 = vld [vmem:[%s192 + $0x60] sm:$0xff]
      %v215 = vld [vmem:[%s192 + $0x68] sm:$0xff]
      %v216 = vld [vmem:[%s192 + $0x70] sm:$0xff]
      %v217 = vld [vmem:[%s192 + $0x78] sm:$0xff]
      %v218 = vld [vmem:[%s192 + $0x80] sm:$0xff]
      %v219 = vld [vmem:[%s192 + $0x88] sm:$0xff]
      %v220 = vld [vmem:[%s192 + $0x90] sm:$0xff]
      %v221 = vld [vmem:[%s192 + $0x98] sm:$0xff]
      %v222 = vld [vmem:[%s192 + $0xa0] sm:$0xff]
      %v223 = vld [vmem:[%s192 + $0xa8] sm:$0xff]
      %v224 = vld [vmem:[%s192 + $0xb0] sm:$0xff]
      %v225 = vld [vmem:[%s192 + $0xb8] sm:$0xff]
      %v226 = vld [vmem:[%s192 + $0xc0] sm:$0xff]
      %v227 = vld [vmem:[%s192 + $0xc8] sm:$0xff]
      %v228 = vld [vmem:[%s192 + $0xd0] sm:$0xff]
      %v229 = vld [vmem:[%s192 + $0xd8] sm:$0xff]
      %v230 = vld [vmem:[%s192 + $0xe0] sm:$0xff]
      %v231 = vld [vmem:[%s192 + $0xe8] sm:$0xff]
      %v232 = vld [vmem:[%s192 + $0xf0] sm:$0xff]
      %v233 = vld [vmem:[%s192 + $0xf8] sm:$0xff]
      %234 = vmatprep.subr.mxu0 %v203
      %235 = vmatpush1.msra.mxu0 %v202
      %236 = vmatprep.subr.mxu0 %v205
      %237 = vmatpush1.msra.mxu0 %v204
      %238 = vmatprep.subr.mxu0 %v207
      %239 = vmatpush1.msra.mxu0 %v206
      %240 = vmatprep.subr.mxu0 %v209
      %241 = vmatpush1.msra.mxu0 %v208
      %242 = vmatprep.subr.mxu0 %v211
      %243 = vmatpush1.msra.mxu0 %v210
      %244 = vmatprep.subr.mxu0 %v213
      %245 = vmatpush1.msra.mxu0 %v212
      %246 = vmatprep.subr.mxu0 %v215
      %247 = vmatpush1.msra.mxu0 %v214
      %248 = vmatprep.subr.mxu0 %v217
      %249 = vmatpush1.msra.mxu0 %v216
      %250 = vmatprep.subr.mxu0 %v219
      %251 = vmatpush1.msra.mxu0 %v218
      %252 = vmatprep.subr.mxu0 %v221
      %253 = vmatpush1.msra.mxu0 %v220
      %254 = vmatprep.subr.mxu0 %v223
      %255 = vmatpush1.msra.mxu0 %v222
      %256 = vmatprep.subr.mxu0 %v225
      %257 = vmatpush1.msra.mxu0 %v224
      %258 = vmatprep.subr.mxu0 %v227
      %259 = vmatpush1.msra.mxu0 %v226
      %260 = vmatprep.subr.mxu0 %v229
      %261 = vmatpush1.msra.mxu0 %v228
      %262 = vmatprep.subr.mxu0 %v231
      %263 = vmatpush1.msra.mxu0 %v230
      %264 = vmatprep.subr.mxu0 %v233
      %265 = vmatpush1.msra.mxu0 %v232
      %266 = vmatprep.subr.mxu0 0.0
      %267 = vmatpush1.msra.mxu0 0.0
      %268 = vmatprep.subr.mxu0 0.0
      %269 = vmatpush1.msra.mxu0 0.0
      %270 = vmatprep.subr.mxu0 0.0
      %271 = vmatpush1.msra.mxu0 0.0
      %272 = vmatprep.subr.mxu0 0.0
      %273 = vmatpush1.msra.mxu0 0.0
      %274 = vmatprep.subr.mxu0 0.0
      %275 = vmatpush1.msra.mxu0 0.0
      %276 = vmatprep.subr.mxu0 0.0
      %277 = vmatpush1.msra.mxu0 0.0
      %278 = vmatprep.subr.mxu0 0.0
      %279 = vmatpush1.msra.mxu0 0.0
      %280 = vmatprep.subr.mxu0 0.0
      %281 = vmatpush1.msra.mxu0 0.0
      %282 = vmatprep.subr.mxu0 0.0
      %283 = vmatpush1.msra.mxu0 0.0
      %284 = vmatprep.subr.mxu0 0.0
      %285 = vmatpush1.msra.mxu0 0.0
      %286 = vmatprep.subr.mxu0 0.0
      %287 = vmatpush1.msra.mxu0 0.0
      %288 = vmatprep.subr.mxu0 0.0
      %289 = vmatpush1.msra.mxu0 0.0
      %290 = vmatprep.subr.mxu0 0.0
      %291 = vmatpush1.msra.mxu0 0.0
      %292 = vmatprep.subr.mxu0 0.0
      %293 = vmatpush1.msra.mxu0 0.0
      %294 = vmatprep.subr.mxu0 0.0
      %295 = vmatpush1.msra.mxu0 0.0
      %296 = vmatprep.subr.mxu0 0.0
      %297 = vmatpush1.msra.mxu0 0.0
      %298 = vmatprep.mubr.f32.mxu0 0.0
      %299 = vmatmul.mubr.f32.gmra.mrb[0].mxu0 %v198
      %v300 = vpop.f32.mrb[0].mxu0
      %v301 = vadd.f32 0.0, %v300
      %v302 = vpop.f32.mrb[0].mxu0
      %v303 = vadd.f32 0.0, %v302
      %304 = vmatprep.mubr.f32.mxu0 0.0
      %305 = vmatmul.mubr.f32.gmra.mrb[0].mxu0 %v199
      %v306 = vpop.f32.mrb[0].mxu0
      %v307 = vadd.f32 0.0, %v306
      %v308 = vpop.f32.mrb[0].mxu0
      %v309 = vadd.f32 0.0, %v308
      %310 = vmatprep.mubr.f32.mxu0 0.0
      %311 = vmatmul.mubr.f32.gmra.mrb[0].mxu0 %v200
      %v312 = vpop.f32.mrb[0].mxu0
      %v313 = vadd.f32 0.0, %v312
      %v314 = vpop.f32.mrb[0].mxu0
      %v315 = vadd.f32 0.0, %v314
      %316 = vmatprep.mubr.f32.mxu0 0.0
      %317 = vmatmul.mubr.f32.gmra.mrb[0].mxu0 %v201
      %v318 = vpop.f32.mrb[0].mxu0
      %v319 = vadd.f32 0.0, %v318
      %v320 = vpop.f32.mrb[0].mxu0
      %v321 = vadd.f32 0.0, %v320
      %322 = vdwg.mxu0
      %v323 = vlaneseq
      %v324 = vshrl.u32 %v323, 7
      %v325 = vadd.s32 %v324, 8
      %v326 = vadd.s32 %v324, 16
      %v327 = vadd.s32 %v324, 24
      %v328 = vcvt.s32.f32 %v324
      %v329 = vcvt.s32.f32 %v325
      %v330 = vcvt.s32.f32 %v326
      %v331 = vcvt.s32.f32 %v327
      %v332 = vlaneseq
      %v333 = vand.u32 %v332, 127
      %v334 = vcvt.s32.f32 %v333
      %v335 = vrcp.pop 2.0
      %v336 = vmul.f32 %v328, %v335
      %v337 = vmul.f32 %v329, %v335
      %v338 = vmul.f32 %v330, %v335
      %v339 = vmul.f32 %v331, %v335
      %v340 = vfloor.f32 %v336
      %v341 = vfloor.f32 %v337
      %v342 = vfloor.f32 %v338
      %v343 = vfloor.f32 %v339
      %v344 = vmul.f32 %v334, %v335
      %v345 = vfloor.f32 %v344
      %vm346 = vcmp.eq.f32.partialorder %v340, %v345
      %vm347 = vcmp.eq.f32.partialorder %v341, %v345
      %vm348 = vcmp.eq.f32.partialorder %v342, %v345
      %vm349 = vcmp.eq.f32.partialorder %v343, %v345
      %v350 = vsel %vm346, 1, 0
      %v351 = vsel %vm347, 1, 0
      %v352 = vsel %vm348, 1, 0
      %v353 = vsel %vm349, 1, 0
      %v354 = vcvt.s32.f32 %v350
      %v355 = vcvt.s32.f32 %v351
      %v356 = vcvt.s32.f32 %v352
      %v357 = vcvt.s32.f32 %v353
      %v358 = vadd.f32 %v301, %v303
      %359 = vadd.xlane.f32.xlu0 %v358
      %v360 = vpop.xlane.xlu0 %359
      %v361 = vadd.f32 %v307, %v309
      %362 = vadd.xlane.f32.xlu0 %v361
      %v363 = vpop.xlane.xlu0 %362
      %v364 = vadd.f32 %v313, %v315
      %365 = vadd.xlane.f32.xlu0 %v364
      %v366 = vpop.xlane.xlu0 %365
      %v367 = vadd.f32 %v319, %v321
      %368 = vadd.xlane.f32.xlu0 %v367
      %v369 = vpop.xlane.xlu0 %368
      %v370 = vmul.f32 %v354, %v360
      %v371 = vmul.f32 %v355, %v363
      %v372 = vmul.f32 %v356, %v366
      %v373 = vmul.f32 %v357, %v369
      %vm374 = vcmask 261120
      %v375 = vsel %vm374, %v370, 0.0
      %v376 = vsel %vm374, %v371, 0.0
      %v377 = vadd.f32 %v375, %v376
      %v378 = vsel %vm374, %v372, 0.0
      %v379 = vadd.f32 %v377, %v378
      %v380 = vsel %vm374, %v373, 0.0
      %v381 = vadd.f32 %v379, %v380
      %v382 = vrot.slane %v381, 4
      %v383 = vadd.f32 %v381, %v382
      %v384 = vrot.slane %v383, 2
      %v385 = vadd.f32 %v383, %v384
      %v386 = vrot.slane %v385, 1
      %v387 = vadd.f32 %v385, %v386
      %v388 = vmul.f32 %v354, %v387
      %v389 = vmul.f32 %v355, %v387
      %v390 = vmul.f32 %v356, %v387
      %v391 = vmul.f32 %v357, %v387
      %v392 = vsel %vm374, %v388, 0.0
      %393 = vadd.xlane.f32.xlu0 %v392
      %v394 = vpop.xlane.xlu0 %393
      %v395 = vsel %vm374, %v389, 0.0
      %396 = vadd.xlane.f32.xlu0 %v395
      %v397 = vpop.xlane.xlu0 %396
      %v398 = vsel %vm374, %v390, 0.0
      %399 = vadd.xlane.f32.xlu0 %v398
      %v400 = vpop.xlane.xlu0 %399
      %v401 = vsel %vm374, %v391, 0.0
      %402 = vadd.xlane.f32.xlu0 %v401
      %v403 = vpop.xlane.xlu0 %402
      %v404 = vrcp.pop 1024.0
      %v405 = vmul.f32 %v394, %v404
      %v406 = vmul.f32 %v397, %v404
      %v407 = vmul.f32 %v400, %v404
      %v408 = vmul.f32 %v403, %v404
      %v409 = vsub.f32 %v301, %v405
      %v410 = vsub.f32 %v303, %v405
      %v411 = vsub.f32 %v307, %v406
      %v412 = vsub.f32 %v309, %v406
      %v413 = vsub.f32 %v313, %v407
      %v414 = vsub.f32 %v315, %v407
      %v415 = vsub.f32 %v319, %v408
      %v416 = vsub.f32 %v321, %v408
      %v417 = vmul.f32 %v409, %v409
      %v418 = vmul.f32 %v410, %v410
      %v419 = vmul.f32 %v411, %v411
      %v420 = vmul.f32 %v412, %v412
      %v421 = vmul.f32 %v413, %v413
      %v422 = vmul.f32 %v414, %v414
      %v423 = vmul.f32 %v415, %v415
      %v424 = vmul.f32 %v416, %v416
      %v425 = vadd.f32 %v417, %v418
      %426 = vadd.xlane.f32.xlu0 %v425
      %v427 = vpop.xlane.xlu0 %426
      %v428 = vadd.f32 %v419, %v420
      %429 = vadd.xlane.f32.xlu0 %v428
      %v430 = vpop.xlane.xlu0 %429
      %v431 = vadd.f32 %v421, %v422
      %432 = vadd.xlane.f32.xlu0 %v431
      %v433 = vpop.xlane.xlu0 %432
      %v434 = vadd.f32 %v423, %v424
      %435 = vadd.xlane.f32.xlu0 %v434
      %v436 = vpop.xlane.xlu0 %435
      %v437 = vmul.f32 %v354, %v427
      %v438 = vmul.f32 %v355, %v430
      %v439 = vmul.f32 %v356, %v433
      %v440 = vmul.f32 %v357, %v436
      %v441 = vsel %vm374, %v437, 0.0
      %v442 = vsel %vm374, %v438, 0.0
      %v443 = vadd.f32 %v441, %v442
      %v444 = vsel %vm374, %v439, 0.0
      %v445 = vadd.f32 %v443, %v444
      %v446 = vsel %vm374, %v440, 0.0
      %v447 = vadd.f32 %v445, %v446
      %v448 = vrot.slane %v447, 4
      %v449 = vadd.f32 %v447, %v448
      %v450 = vrot.slane %v449, 2
      %v451 = vadd.f32 %v449, %v450
      %v452 = vrot.slane %v451, 1
      %v453 = vadd.f32 %v451, %v452
      %v454 = vrcp.pop 512.0
      %v455 = vmul.f32 %v453, %v454
      %v456 = vadd.f32 %v455, 1e-05
      %v457 = vrsqrt.pop %v456
      %v458 = vmul.f32 %v354, %v457
      %v459 = vmul.f32 %v355, %v457
      %v460 = vmul.f32 %v356, %v457
      %v461 = vmul.f32 %v357, %v457
      %v462 = vsel %vm374, %v458, 0.0
      %463 = vadd.xlane.f32.xlu0 %v462
      %v464 = vpop.xlane.xlu0 %463
      %v465 = vsel %vm374, %v459, 0.0
      %466 = vadd.xlane.f32.xlu0 %v465
      %v467 = vpop.xlane.xlu0 %466
      %v468 = vsel %vm374, %v460, 0.0
      %469 = vadd.xlane.f32.xlu0 %v468
      %v470 = vpop.xlane.xlu0 %469
      %v471 = vsel %vm374, %v461, 0.0
      %472 = vadd.xlane.f32.xlu0 %v471
      %v473 = vpop.xlane.xlu0 %472
      %v474 = vmul.f32 %v464, %v335
      %v475 = vmul.f32 %v467, %v335
      %v476 = vmul.f32 %v470, %v335
      %v477 = vmul.f32 %v473, %v335
      %v478 = vld [vmem:[%s2] sm:$0xff]
      %v479 = vld [vmem:[%s2 + $0x8] sm:$0xff]
      %v480 = vld [vmem:[%s2 + $0x10] sm:$0xff]
      %v481 = vld [vmem:[%s2 + $0x18] sm:$0xff]
      %v482 = vmul.f32 %v474, %v478
      %v483 = vmul.f32 %v475, %v479
      %v484 = vmul.f32 %v476, %v480
      %v485 = vmul.f32 %v477, %v481
      %487 = vset.pattern.permute.xlu0 0
      %488 = vperm.xlu0 %487, %v482
      %v489 = vpop.permute.xlu0 %488
      %492 = vset.pattern.permute.xlu0 0
      %493 = vperm.xlu0 %492, %v483
      %v494 = vpop.permute.xlu0 %493
      %497 = vset.pattern.permute.xlu0 0
      %498 = vperm.xlu0 %497, %v484
      %v499 = vpop.permute.xlu0 %498
      %502 = vset.pattern.permute.xlu0 0
      %503 = vperm.xlu0 %502, %v485
      %v504 = vpop.permute.xlu0 %503
      %v506 = vmul.f32 %v409, %v489
      %v507 = vmul.f32 %v410, %v489
      %v508 = vmul.f32 %v411, %v494
      %v509 = vmul.f32 %v412, %v494
      %v510 = vmul.f32 %v413, %v499
      %v511 = vmul.f32 %v414, %v499
      %v512 = vmul.f32 %v415, %v504
      %v513 = vmul.f32 %v416, %v504
      %v514 = vld [vmem:[%s3] sm:$0xff]
      %v515 = vld [vmem:[%s3 + $0x8] sm:$0xff]
      %v516 = vld [vmem:[%s3 + $0x10] sm:$0xff]
      %v517 = vld [vmem:[%s3 + $0x18] sm:$0xff]
      %519 = vset.pattern.permute.xlu0 0
      %520 = vperm.xlu0 %519, %v514
      %v521 = vpop.permute.xlu0 %520
      %524 = vset.pattern.permute.xlu0 0
      %525 = vperm.xlu0 %524, %v515
      %v526 = vpop.permute.xlu0 %525
      %529 = vset.pattern.permute.xlu0 0
      %530 = vperm.xlu0 %529, %v516
      %v531 = vpop.permute.xlu0 %530
      %534 = vset.pattern.permute.xlu0 0
      %535 = vperm.xlu0 %534, %v517
      %v536 = vpop.permute.xlu0 %535
      %v538 = vadd.f32 %v506, %v521
      %v539 = vadd.f32 %v507, %v521
      %v540 = vadd.f32 %v508, %v526
      %v541 = vadd.f32 %v509, %v526
      %v542 = vadd.f32 %v510, %v531
      %v543 = vadd.f32 %v511, %v531
      %v544 = vadd.f32 %v512, %v536
      %v545 = vadd.f32 %v513, %v536
      %v546 = vmax.f32 %v538, 0.0
      %v547 = vmax.f32 %v539, 0.0
      %v548 = vmax.f32 %v540, 0.0
      %v549 = vmax.f32 %v541, 0.0
      %v550 = vmax.f32 %v542, 0.0
      %v551 = vmax.f32 %v543, 0.0
      %v552 = vmax.f32 %v544, 0.0
      %v553 = vmax.f32 %v545, 0.0
      %554 = vst [vmem:[%s197] sm:$0xff] %v546
      %555 = vst [vmem:[%s197 + $0x8] sm:$0xff] %v547
      %556 = vst [vmem:[%s197 + $0x10] sm:$0xff] %v548
      %557 = vst [vmem:[%s197 + $0x18] sm:$0xff] %v549
      %558 = vst [vmem:[%s197 + $0x20] sm:$0xff] %v550
      %559 = vst [vmem:[%s197 + $0x28] sm:$0xff] %v551
      %560 = vst [vmem:[%s197 + $0x30] sm:$0xff] %v552
      %561 = vst [vmem:[%s197 + $0x38] sm:$0xff] %v553
      %p562 = scmp.lt.s32.totalorder %s15, 1
      %s563 = scalar_select %p562, %s15, 1
      %s564 = smul.addr %s563, 8
      %s565 = smul.addr %s564, 8
      %s566 = scalar_lea.vmem %s4, %s565
      // Predicated region
      $region37: #{aspp_forward.1} parent=35 // pred_check
        %p567 = pneg %p122
      $region38: #{aspp_forward.1} parent=35 // pred_check_branch
        %569 = sbr.rel (%p567) target = $region40
      $region39: #{aspp_forward.1} parent=35 // pred_region
        _
      $region40: #{aspp_forward.1} parent=35 // pred_fallthru
        _
    $region36: #{aspp_forward.1} parent=5 // pred_fallthru
      _
    %p570 = scmp.le.s32.totalorder 2, %s10
    // Predicated region
    $region41: #{aspp_forward.1} parent=5 // pred_check
      %p571 = pneg %p570
    $region42: #{aspp_forward.1} parent=5 // pred_check_branch
      %573 = sbr.rel (%p571) target = $region44
    $region43: #{aspp_forward.1} parent=5 // pred_region
      %s574 = ssub.s32 %s10, 2
      // Predicated region
      $region45: #{aspp_forward.1} parent=43 // pred_check
        %p575 = pneg %p128
      $region46: #{aspp_forward.1} parent=43 // pred_check_branch
        %577 = sbr.rel (%p575) target = $region48
      $region47: #{aspp_forward.1} parent=43 // pred_region
        %p578 = scmp.lt.s32.totalorder %s16, 1
        %s579 = scalar_select %p578, %s16, 1
        %s580 = smul.addr %s579, 8
        %s581 = smul.addr %s580, 8
        %s582 = scalar_lea.vmem %s4, %s581
      $region48: #{aspp_forward.1} parent=43 // pred_fallthru
        _
    $region44: #{aspp_forward.1} parent=5 // pred_fallthru
      _
  $region6: #{aspp_forward.1} parent=0 // loop_footer
    %s14 = sadd.s32 1, %s10
  $region7: #{aspp_forward.1} parent=0 // loop_footer_branch
    %9 = sbr.rel target = $region3
  $region8: #{aspp_forward.1} parent=0 // loop_exit
    _

</llo_original>
